<compile_context>
chip_gen: v5e
topology: v5e:2x2
jax: 0.10.0
libtpu: 0.0.40
codegen_flags: <defaults>
</compile_context>

<pallas_src>
from functools import partial

import jax
import jax.numpy as jnp
from jax.experimental import pallas as pl
from jax.experimental.pallas import tpu as pltpu


def _round_up(x, m):
    return (x + m - 1) // m * m


def _relu(x):
    return jnp.maximum(x, 0.0)


# --------------------------------------------------------------------------- #
# Parameter packing: 20 tensors -> one weight slab + one bias slab             #
# --------------------------------------------------------------------------- #
def pack_params(params, input_dim, self_state_dim, mlp1_dims, mlp2_dims,
                attention_dims, mlp3_dims, compute_dtype=jnp.bfloat16):
    """Pack the 20 (w, b) tensors into one weight slab + one bias slab.

    Slab layout (all blocks are `wide = 2*cols` lanes; rows padded to multiples of 16
    so bf16 sublane packing never forces a relayout when slicing):

      0  w10                  (din_pad , wide)
      1  w11                  (wide    , wide)
      2  w20 | wa0_h1         (wide    , wide)  fused: both consume h1 (shared LHS)
      3  wa0_gs               (wide    , wide)  global-state half -> right lanes
      4  w21 \\ wa1           (wide    , wide)  block-diagonal fuse (mlp2-l1 | att-l1)
      5  wa2                  (wide    , wide)  rows select right-half lanes only
      6  w30_self             (sdim_pad, wide)
      7  w30_feat             (wide    , wide)
      8  w31                  (wide    , wide)
      9  w32                  (wide    , wide)

    Everything not placed is zero, so the unused / "garbage" lanes of every activation
    hit zero weight rows and contribute nothing.  Weights are (in, out) and cast to
    `compute_dtype` (bf16 default = MXU-native operands, f32 accumulation).  Biases stay
    f32 (element-wise path).
    """
    (w10, b10, w11, b11,
     w20, b20, w21, b21,
     wa0, ba0, wa1, ba1, wa2, ba2,
     w30, b30, w31, b31, w32, b32) = [jnp.asarray(p, jnp.float32) for p in params]

    assert len(mlp1_dims) == 2 and len(mlp2_dims) == 2
    assert len(attention_dims) == 3 and len(mlp3_dims) == 3
    assert self_state_dim <= input_dim

    d1 = mlp1_dims[-1]
    out_dim = mlp3_dims[-1]
    cols = _round_up(max(mlp1_dims + mlp2_dims + attention_dims + mlp3_dims), 8)
    wide = 2 * cols
    din_pad = _round_up(input_dim, 16)
    sdim_pad = _round_up(self_state_dim, 16)
    assert sdim_pad <= din_pad

    # split the two concat-consuming first layers
    wa0_h1, wa0_gs = wa0[:d1], wa0[d1:]
    w30_self, w30_feat = w30[:self_state_dim], w30[self_state_dim:]

    def block(rows, placements):
        blk = jnp.zeros((rows, wide), jnp.float32)
        for arr, ro, co in placements:
            r, c = arr.shape
            assert ro + r <= rows and co + c <= wide
            blk = blk.at[ro:ro + r, co:co + c].set(arr)
        return blk

    blocks = [
        block(din_pad,  [(w10, 0, 0)]),                        # 0
        block(wide,     [(w11, 0, 0)]),                        # 1
        block(wide,     [(w20, 0, 0), (wa0_h1, 0, cols)]),     # 2 fused (shared LHS h1)
        block(wide,     [(wa0_gs, 0, cols)]),                  # 3 global-state half
        block(wide,     [(w21, 0, 0), (wa1, cols, cols)]),     # 4 block-diagonal fuse
        block(wide,     [(wa2, cols, 0)]),                     # 5 attention l2
        block(sdim_pad, [(w30_self, 0, 0)]),                   # 6 mlp3 l0, self-state half
        block(wide,     [(w30_feat, 0, 0)]),                   # 7 mlp3 l0, weighted half
        block(wide,     [(w31, 0, 0)]),                        # 8
        block(wide,     [(w32, 0, 0)]),                        # 9
    ]
    w_offs, off = [], 0
    for blk in blocks:
        w_offs.append((off, blk.shape[0]))
        off += blk.shape[0]
    w_slab = jnp.concatenate(blocks, axis=0).astype(compute_dtype)

    def brow(placements):
        row = jnp.zeros((1, wide), jnp.float32)
        for arr, co in placements:
            arr = arr.reshape(1, -1)
            row = row.at[:, co:co + arr.shape[1]].set(arr)
        return row

    b_slab = jnp.concatenate([
        brow([(b10, 0)]),                 # 0
        brow([(b11, 0)]),                 # 1
        brow([(b20, 0), (ba0, cols)]),    # 2 fused bias row
        brow([(b21, 0), (ba1, cols)]),    # 3 fused bias row
        brow([(ba2, 0)]),                 # 4
        brow([(b30, 0)]),                 # 5
        brow([(b31, 0)]),                 # 6
        brow([(b32, 0)]),                 # 7
    ], axis=0)                            # (8, wide) float32

    meta = (cols, out_dim)
    return w_slab, b_slab, tuple(w_offs), meta


# --------------------------------------------------------------------------- #
# Kernel                                                                       #
# --------------------------------------------------------------------------- #
def value_network_kernel(cols, w_offs, state_ref, w_ref, b_ref, out_ref):
    TB, N, din = state_ref.shape
    wide = w_ref.shape[1]
    cd = w_ref.dtype                      # matmul operand dtype (bf16 or f32)
    din_pad = w_offs[0][1]
    sdim_pad = w_offs[6][1]

    b_all = b_ref[...]                    # single (8, wide) load; rows sliced in-vreg

    def W(i):
        o, r = w_offs[i]                  # static, 16-row-aligned offsets
        return w_ref[o:o + r, :]

    def bias(i):
        return b_all[i:i + 1, :]

    def mm(x, wi):
        return jnp.dot(x.astype(cd), W(wi), preferred_element_type=jnp.float32)

    # ---- load + in-kernel lane pad (replaces the old wrapper-side jnp.pad) ----
    x = state_ref[...].astype(jnp.float32).reshape(TB * N, din)
    if din_pad > din:
        x = jnp.concatenate(
            [x, jnp.zeros((TB * N, din_pad - din), jnp.float32)], axis=-1)

    # ---- mlp1 (ReLU after every layer) ----
    h0 = _relu(mm(x, 0) + bias(0))
    h1 = _relu(mm(h0, 1) + bias(1))                        # (TB*N, wide); lanes >= d1 are 0

    # ---- global state = mean of h1 over agents; its attention-l0 contribution ----
    gs = jnp.mean(h1.reshape(TB, N, wide), axis=1)         # (TB, wide)
    gs_c = mm(gs, 3)                                       # only right-half lanes nonzero

    # ---- fused matmul: [mlp2-l0 | attention-l0 (h1 half)] share LHS h1 ----
    f0 = mm(h1, 2) + bias(2)
    a1_in = _relu(f0.reshape(TB, N, wide) + gs_c[:, None, :]).reshape(TB * N, wide)

    # ---- fused block-diagonal matmul: [mlp2-l1 | attention-l1] ----
    act2 = mm(a1_in, 4) + bias(3)     # left lanes: feat (mlp2 out), right lanes: att-l1 pre-relu

    # ---- attention l2 -> scores (W(5) rows pick only the right-half lanes) ----
    sc = mm(_relu(act2), 5) + bias(4)                      # only lane 0 nonzero
    scores = jnp.sum(sc.reshape(TB, N, wide), axis=-1)     # (TB, N), lane-dense

    # ---- softmax over agents; (scores != 0) sentinel mask as in the reference ----
    mask = (scores != 0.0).astype(jnp.float32)
    e = jnp.exp(scores - jnp.max(scores, axis=1, keepdims=True)) * mask
    denom = jnp.sum(e, axis=1, keepdims=True)
    # Deliberate divergence: reference NaNs on an all-masked row; we return zero weights.
    denom = jnp.where(denom == 0.0, 1.0, denom)
    weights = e / denom                                    # exact reciprocal (output-facing)

    # ---- weighted feature sum over agents on the MXU (no lane->sublane relayout) ----
    feat3 = act2.reshape(TB, N, wide)
    weighted = jnp.einsum(
        "bqn,bnc->bqc", weights[:, None, :].astype(cd), feat3.astype(cd),
        preferred_element_type=jnp.float32)[:, 0, :]       # (TB, wide)
    # right-half lanes of `weighted` are attention junk -> killed by zero rows of W(7)

    # ---- mlp3 on cat([self_state, weighted]) via the split first layer ----
    self_s = x.reshape(TB, N, din_pad)[:, 0, :sdim_pad]    # extra real cols hit zero rows
    j = _relu(mm(self_s, 6) + mm(weighted, 7) + bias(5))
    j = _relu(mm(j, 8) + bias(6))
    v = mm(j, 9) + bias(7)                                 # (TB, wide); value in lanes [0, out_dim)

    # ---- one lane-dense (TB, wide) output slab: [ value | attention weights | 0 ] ----
    pieces = [v[:, :cols], weights]
    if cols > N:
        pieces.append(jnp.zeros((TB, cols - N), jnp.float32))
    out_ref[...] = jnp.concatenate(pieces, axis=-1)


# --------------------------------------------------------------------------- #
# Wrapper                                                                      #
# --------------------------------------------------------------------------- #
def make_value_network_forward(B, N, input_dim, w_offs, meta, *, batch_tile=None):
    cols, out_dim = meta
    wide = 2 * cols
    assert N <= cols
    kernel = partial(value_network_kernel, cols, w_offs)
    vmem = pl.BlockSpec(memory_space=pltpu.MemorySpace.VMEM)

    @jax.jit
    def forward(state, w_slab, b_slab):
        assert state.shape == (B, N, input_dim)
        # advisory cost estimate so XLA schedules around this cheap custom call
        mm_shapes = ([(B * N, w_offs[0][1], wide)] + [(B * N, wide, wide)] * 4
                     + [(B, wide, wide)] * 4
                     + [(B, N, wide), (B, w_offs[6][1], wide)])
        cost = pl.CostEstimate(
            flops=int(sum(2 * m * k * n for m, k, n in mm_shapes)),
            transcendentals=int(B * N),
            bytes_accessed=int(state.size * state.dtype.itemsize
                               + w_slab.size * w_slab.dtype.itemsize
                               + b_slab.size * b_slab.dtype.itemsize
                               + B * wide * 4))
        out_shape = jax.ShapeDtypeStruct((B, wide), jnp.float32)

        if batch_tile is None or batch_tile >= B:
            # tiny batch: grid-less single program (no per-grid-step overhead)
            out = pl.pallas_call(
                kernel, out_shape=out_shape,
                in_specs=[vmem, vmem, vmem], out_specs=vmem,
                cost_estimate=cost,
            )(state, w_slab, b_slab)
        else:
            # production batch: parallel batch grid (uses both v7x TensorCores);
            # the weight/bias slabs stay resident (constant block index).
            assert B % batch_tile == 0
            out = pl.pallas_call(
                kernel, out_shape=out_shape,
                grid=(B // batch_tile,),
                in_specs=[pl.BlockSpec((batch_tile, N, input_dim), lambda i: (i, 0, 0)),
                          pl.BlockSpec(w_slab.shape, lambda i: (0, 0)),
                          pl.BlockSpec(b_slab.shape, lambda i: (0, 0))],
                out_specs=pl.BlockSpec((batch_tile, wide), lambda i: (i, 0)),
                compiler_params=pltpu.CompilerParams(
                    dimension_semantics=("parallel",)),
                cost_estimate=cost,
            )(state, w_slab, b_slab)

        # lane-dense output slab -> (value, attention weights)
        return out[:, :out_dim], out[:, cols:cols + N]

    return forward


# --------------------------------------------------------------------------- #
# Init + pure-JAX reference + demo                                             #
# --------------------------------------------------------------------------- #
def init_mlp_params(key, dims, scale=0.2):
    """Deterministic init; weights stored as (in, out), biases as (1, out)."""
    params = []
    for i in range(len(dims) - 1):
        key, kw, kb = jax.random.split(key, 3)
        w = scale * jax.random.normal(kw, (dims[i], dims[i + 1]), jnp.float32)
        b = scale * jax.random.normal(kb, (1, dims[i + 1]), jnp.float32)
        params += [w, b]
    return params


def reference_forward(state, self_state_dim, params):
    (w10, b10, w11, b11, w20, b20, w21, b21,
     wa0, ba0, wa1, ba1, wa2, ba2,
     w30, b30, w31, b31, w32, b32) = params
    B, N, Din = state.shape
    relu = lambda v: jnp.maximum(v, 0.0)
    x = state.reshape(B * N, Din)
    h1 = relu(relu(x @ w10 + b10) @ w11 + b11)
    feat = relu(h1 @ w20 + b20) @ w21 + b21
    gs = jnp.mean(h1.reshape(B, N, -1), axis=1, keepdims=True)
    gs = jnp.broadcast_to(gs, (B, N, h1.shape[-1])).reshape(B * N, -1)
    att_in = jnp.concatenate([h1, gs], axis=1)
    a = relu(relu(att_in @ wa0 + ba0) @ wa1 + ba1)
    scores = (a @ wa2 + ba2).reshape(B, N)
    scores_exp = jnp.exp(scores) * (scores != 0.0)
    weights = scores_exp / jnp.sum(scores_exp, axis=1, keepdims=True)
    weighted = jnp.sum(weights[:, :, None] * feat.reshape(B, N, -1), axis=1)
    joint = jnp.concatenate([state[:, 0, :self_state_dim], weighted], axis=1)
    value = relu(relu(joint @ w30 + b30) @ w31 + b31) @ w32 + b32
    return value, weights


if __name__ == "__main__":
    # Small shapes consistent with the SARL ValueNetwork
    B, N = 2, 8                      # batch, number of agents
    input_dim = 13
    self_state_dim = 6
    mlp1_dims = [64, 64]
    mlp2_dims = [64, 32]
    attention_dims = [64, 64, 1]     # with_global_state=True -> attention input = 2 * mlp1_dims[-1]
    mlp3_dims = [64, 64, 1]          # input = mlp2_dims[-1] + self_state_dim
    # TODO(synk): cell_size / cell_num are stored in __init__ but unused in forward; omitted.
    # TODO(synk): self.attention_weights host-side .cpu().numpy() stash is returned as a
    #             second device output (per-batch attention weights) instead.

    key = jax.random.PRNGKey(0)
    k_in, k_p = jax.random.split(key)
    state = jax.random.normal(k_in, (B, N, input_dim), jnp.float32)

    k1, k2, ka, k3 = jax.random.split(k_p, 4)
    p_mlp1 = init_mlp_params(k1, [input_dim] + mlp1_dims)
    p_mlp2 = init_mlp_params(k2, [mlp1_dims[-1]] + mlp2_dims)
    p_attn = init_mlp_params(ka, [mlp1_dims[-1] * 2] + attention_dims)
    p_mlp3 = init_mlp_params(k3, [mlp2_dims[-1] + self_state_dim] + mlp3_dims)
    params = p_mlp1 + p_mlp2 + p_attn + p_mlp3

    v_ref, aw_ref = reference_forward(state, self_state_dim, params)

    # ---- f32 slab: numerical fidelity check (residual diff is only TPU matmul
    #      default-precision reordering in the XLA reference; approx recip removed) ----
    w_slab32, b_slab32, w_offs, meta = pack_params(
        params, input_dim, self_state_dim, mlp1_dims, mlp2_dims,
        attention_dims, mlp3_dims, compute_dtype=jnp.float32)
    fwd_f32 = make_value_network_forward(B, N, input_dim, w_offs, meta)
    value, attw = fwd_f32(state, w_slab32, b_slab32)
    jax.block_until_ready((value, attw))
    assert value.shape == (B, mlp3_dims[-1]) and attw.shape == (B, N)
    assert jnp.allclose(value, v_ref, rtol=2e-2, atol=2e-3)
    assert jnp.allclose(attw, aw_ref, rtol=2e-2, atol=2e-3)

    # ---- bf16 slab (production / perf configuration): MXU operands are deliberately
    #      quantized to bf16 (f32 accumulation) -> loose, quantization-level tolerance;
    #      bit-level structure is already validated by the f32 run above. ----
    w_slab16, b_slab16, w_offs16, meta16 = pack_params(
        params, input_dim, self_state_dim, mlp1_dims, mlp2_dims,
        attention_dims, mlp3_dims, compute_dtype=jnp.bfloat16)
    fwd_bf16 = make_value_network_forward(B, N, input_dim, w_offs16, meta16)
    value_b, attw_b = fwd_bf16(state, w_slab16, b_slab16)
    jax.block_until_ready((value_b, attw_b))
    assert jnp.allclose(value_b, v_ref, rtol=1e-1, atol=5e-2)
    assert jnp.allclose(attw_b, aw_ref, rtol=1e-1, atol=5e-2)

    # ---- parallel batch grid (v7x two-TensorCore path) at a larger batch ----
    B2 = 16
    state2 = jax.random.normal(jax.random.PRNGKey(1), (B2, N, input_dim), jnp.float32)
    v_ref2, aw_ref2 = reference_forward(state2, self_state_dim, params)
    fwd_grid = make_value_network_forward(B2, N, input_dim, w_offs16, meta16, batch_tile=8)
    value2, attw2 = fwd_grid(state2, w_slab16, b_slab16)
    jax.block_until_ready((value2, attw2))
    assert value2.shape == (B2, mlp3_dims[-1]) and attw2.shape == (B2, N)
    assert jnp.allclose(value2, v_ref2, rtol=1e-1, atol=5e-2)
    assert jnp.allclose(attw2, aw_ref2, rtol=1e-1, atol=5e-2)

    print("KERNEL_OK")
</pallas_src>

<mosaic_0001>
module attributes {stable_mosaic.version = 11 : i64} {
  func.func @value_network_kernel(%arg0: memref<2x8x13xf32, #tpu.memory_space<vmem>>, %arg1: memref<1056x128xf32, #tpu.memory_space<vmem>>, %arg2: memref<8x128xf32, #tpu.memory_space<vmem>>, %arg3: memref<2x128xf32, #tpu.memory_space<vmem>>) attributes {dimension_semantics = [], scalar_prefetch = 0 : i64, scratch_operands = 0 : i64, tpu.core_type = #tpu.core_type<tc>} {
    %c0 = arith.constant 0 : index
    %c0_0 = arith.constant 0 : index
    %0 = vector.load %arg2[%c0, %c0_0] : memref<8x128xf32, #tpu.memory_space<vmem>>, vector<8x128xf32>
    %c0_1 = arith.constant 0 : index
    %c0_2 = arith.constant 0 : index
    %c0_3 = arith.constant 0 : index
    %1 = vector.load %arg0[%c0_1, %c0_2, %c0_3] : memref<2x8x13xf32, #tpu.memory_space<vmem>>, vector<2x8x13xf32>
    %2 = vector.shape_cast %1 : vector<2x8x13xf32> to vector<16x13xf32>
    %cst = arith.constant 0.000000e+00 : f32
    %3 = vector.broadcast %cst : f32 to vector<16x3xf32>
    %4 = tpu.concatenate %2, %3 in 1 : vector<16x13xf32>, vector<16x3xf32> -> vector<16x16xf32>
    %c0_4 = arith.constant 0 : index
    %c0_5 = arith.constant 0 : index
    %5 = vector.load %arg1[%c0_4, %c0_5] : memref<1056x128xf32, #tpu.memory_space<vmem>>, vector<16x128xf32>
    %cst_6 = arith.constant dense<0.000000e+00> : vector<16x128xf32>
    %6 = tpu.matmul %4, %5, %cst_6 {dimension_numbers = #tpu.dot_dimension_numbers<[1], [0], [0], [1], [0, 0, 1, 1], [], []>} : vector<16x16xf32>, vector<16x128xf32>, vector<16x128xf32> -> vector<16x128xf32>
    %7 = vector.extract_strided_slice %0 {offsets = [0, 0], sizes = [1, 128], strides = [1, 1]} : vector<8x128xf32> to vector<1x128xf32>
    %8 = vector.broadcast %7 : vector<1x128xf32> to vector<16x128xf32>
    %9 = arith.addf %6, %8 : vector<16x128xf32>
    %cst_7 = arith.constant 0.000000e+00 : f32
    %10 = vector.broadcast %cst_7 : f32 to vector<16x128xf32>
    %11 = arith.maximumf %9, %10 : vector<16x128xf32>
    %c16 = arith.constant 16 : index
    %c0_8 = arith.constant 0 : index
    %12 = vector.load %arg1[%c16, %c0_8] : memref<1056x128xf32, #tpu.memory_space<vmem>>, vector<128x128xf32>
    %cst_9 = arith.constant dense<0.000000e+00> : vector<16x128xf32>
    %13 = tpu.matmul %11, %12, %cst_9 {dimension_numbers = #tpu.dot_dimension_numbers<[1], [0], [0], [1], [0, 0, 1, 1], [], []>} : vector<16x128xf32>, vector<128x128xf32>, vector<16x128xf32> -> vector<16x128xf32>
    %14 = vector.extract_strided_slice %0 {offsets = [1, 0], sizes = [1, 128], strides = [1, 1]} : vector<8x128xf32> to vector<1x128xf32>
    %15 = vector.broadcast %14 : vector<1x128xf32> to vector<16x128xf32>
    %16 = arith.addf %13, %15 : vector<16x128xf32>
    %cst_10 = arith.constant 0.000000e+00 : f32
    %17 = vector.broadcast %cst_10 : f32 to vector<16x128xf32>
    %18 = arith.maximumf %16, %17 : vector<16x128xf32>
    %19 = vector.shape_cast %18 : vector<16x128xf32> to vector<2x8x128xf32>
    %cst_11 = arith.constant dense<0.000000e+00> : vector<2x128xf32>
    %20 = vector.multi_reduction <add>, %19, %cst_11 [1] : vector<2x8x128xf32> to vector<2x128xf32>
    %cst_12 = arith.constant 8.000000e+00 : f32
    %21 = vector.broadcast %cst_12 : f32 to vector<2x128xf32>
    %22 = arith.divf %20, %21 : vector<2x128xf32>
    %c272 = arith.constant 272 : index
    %c0_13 = arith.constant 0 : index
    %23 = vector.load %arg1[%c272, %c0_13] : memref<1056x128xf32, #tpu.memory_space<vmem>>, vector<128x128xf32>
    %cst_14 = arith.constant dense<0.000000e+00> : vector<2x128xf32>
    %24 = tpu.matmul %22, %23, %cst_14 {dimension_numbers = #tpu.dot_dimension_numbers<[1], [0], [0], [1], [0, 0, 1, 1], [], []>} : vector<2x128xf32>, vector<128x128xf32>, vector<2x128xf32> -> vector<2x128xf32>
    %c144 = arith.constant 144 : index
    %c0_15 = arith.constant 0 : index
    %25 = vector.load %arg1[%c144, %c0_15] : memref<1056x128xf32, #tpu.memory_space<vmem>>, vector<128x128xf32>
    %cst_16 = arith.constant dense<0.000000e+00> : vector<16x128xf32>
    %26 = tpu.matmul %18, %25, %cst_16 {dimension_numbers = #tpu.dot_dimension_numbers<[1], [0], [0], [1], [0, 0, 1, 1], [], []>} : vector<16x128xf32>, vector<128x128xf32>, vector<16x128xf32> -> vector<16x128xf32>
    %27 = vector.extract_strided_slice %0 {offsets = [2, 0], sizes = [1, 128], strides = [1, 1]} : vector<8x128xf32> to vector<1x128xf32>
    %28 = vector.broadcast %27 : vector<1x128xf32> to vector<16x128xf32>
    %29 = arith.addf %26, %28 : vector<16x128xf32>
    %30 = vector.shape_cast %29 : vector<16x128xf32> to vector<2x8x128xf32>
    %31 = vector.shape_cast %24 : vector<2x128xf32> to vector<2x1x128xf32>
    %32 = vector.broadcast %31 : vector<2x1x128xf32> to vector<2x8x128xf32>
    %33 = arith.addf %30, %32 : vector<2x8x128xf32>
    %cst_17 = arith.constant 0.000000e+00 : f32
    %34 = vector.broadcast %cst_17 : f32 to vector<2x8x128xf32>
    %35 = arith.maximumf %33, %34 : vector<2x8x128xf32>
    %36 = vector.shape_cast %35 : vector<2x8x128xf32> to vector<16x128xf32>
    %c400 = arith.constant 400 : index
    %c0_18 = arith.constant 0 : index
    %37 = vector.load %arg1[%c400, %c0_18] : memref<1056x128xf32, #tpu.memory_space<vmem>>, vector<128x128xf32>
    %cst_19 = arith.constant dense<0.000000e+00> : vector<16x128xf32>
    %38 = tpu.matmul %36, %37, %cst_19 {dimension_numbers = #tpu.dot_dimension_numbers<[1], [0], [0], [1], [0, 0, 1, 1], [], []>} : vector<16x128xf32>, vector<128x128xf32>, vector<16x128xf32> -> vector<16x128xf32>
    %39 = vector.extract_strided_slice %0 {offsets = [3, 0], sizes = [1, 128], strides = [1, 1]} : vector<8x128xf32> to vector<1x128xf32>
    %40 = vector.broadcast %39 : vector<1x128xf32> to vector<16x128xf32>
    %41 = arith.addf %38, %40 : vector<16x128xf32>
    %cst_20 = arith.constant 0.000000e+00 : f32
    %42 = vector.broadcast %cst_20 : f32 to vector<16x128xf32>
    %43 = arith.maximumf %41, %42 : vector<16x128xf32>
    %c528 = arith.constant 528 : index
    %c0_21 = arith.constant 0 : index
    %44 = vector.load %arg1[%c528, %c0_21] : memref<1056x128xf32, #tpu.memory_space<vmem>>, vector<128x128xf32>
    %cst_22 = arith.constant dense<0.000000e+00> : vector<16x128xf32>
    %45 = tpu.matmul %43, %44, %cst_22 {dimension_numbers = #tpu.dot_dimension_numbers<[1], [0], [0], [1], [0, 0, 1, 1], [], []>} : vector<16x128xf32>, vector<128x128xf32>, vector<16x128xf32> -> vector<16x128xf32>
    %46 = vector.extract_strided_slice %0 {offsets = [4, 0], sizes = [1, 128], strides = [1, 1]} : vector<8x128xf32> to vector<1x128xf32>
    %47 = vector.broadcast %46 : vector<1x128xf32> to vector<16x128xf32>
    %48 = arith.addf %45, %47 : vector<16x128xf32>
    %49 = vector.shape_cast %48 : vector<16x128xf32> to vector<2x8x128xf32>
    %cst_23 = arith.constant dense<0.000000e+00> : vector<2x8xf32>
    %50 = vector.multi_reduction <add>, %49, %cst_23 [2] : vector<2x8x128xf32> to vector<2x8xf32>
    %cst_24 = arith.constant 0.000000e+00 : f32
    %51 = vector.broadcast %cst_24 : f32 to vector<2x8xf32>
    %52 = arith.cmpf one, %50, %51 : vector<2x8xf32>
    %53 = arith.extui %52 : vector<2x8xi1> to vector<2x8xi32>
    %54 = arith.sitofp %53 : vector<2x8xi32> to vector<2x8xf32>
    %cst_25 = arith.constant dense<0xFF800000> : vector<2xf32>
    %55 = vector.multi_reduction <maximumf>, %50, %cst_25 [1] : vector<2x8xf32> to vector<2xf32>
    %56 = vector.shape_cast %55 : vector<2xf32> to vector<2x1xf32>
    %57 = vector.broadcast %56 : vector<2x1xf32> to vector<2x8xf32>
    %58 = arith.subf %50, %57 : vector<2x8xf32>
    %59 = math.exp %58 : vector<2x8xf32>
    %60 = arith.mulf %59, %54 : vector<2x8xf32>
    %cst_26 = arith.constant dense<0.000000e+00> : vector<2xf32>
    %61 = vector.multi_reduction <add>, %60, %cst_26 [1] : vector<2x8xf32> to vector<2xf32>
    %62 = vector.shape_cast %61 : vector<2xf32> to vector<2x1xf32>
    %cst_27 = arith.constant 0.000000e+00 : f32
    %63 = vector.broadcast %cst_27 : f32 to vector<2x1xf32>
    %64 = arith.cmpf oeq, %62, %63 : vector<2x1xf32>
    %cst_28 = arith.constant 1.000000e+00 : f32
    %65 = vector.broadcast %cst_28 : f32 to vector<2x1xf32>
    %66 = arith.select %64, %65, %62 : vector<2x1xi1>, vector<2x1xf32>
    %67 = vector.broadcast %66 : vector<2x1xf32> to vector<2x8xf32>
    %68 = arith.divf %60, %67 : vector<2x8xf32>
    %69 = vector.shape_cast %41 : vector<16x128xf32> to vector<2x8x128xf32>
    %70 = vector.shape_cast %68 : vector<2x8xf32> to vector<2x1x8xf32>
    "tpu.trace_start"() <{level = 10 : i32, message = "bqn,bnc->bqc"}> : () -> ()
    %cst_29 = arith.constant dense<0.000000e+00> : vector<2x1x128xf32>
    %71 = tpu.matmul %70, %69, %cst_29 {dimension_numbers = #tpu.dot_dimension_numbers<[2], [1], [1], [2], [0, 0, 0, 1, 1, 2], [0], [0]>} : vector<2x1x8xf32>, vector<2x8x128xf32>, vector<2x1x128xf32> -> vector<2x1x128xf32>
    "tpu.trace_stop"() : () -> ()
    %72 = vector.shape_cast %71 : vector<2x1x128xf32> to vector<2x128xf32>
    %73 = vector.shape_cast %4 : vector<16x16xf32> to vector<2x8x16xf32>
    %74 = vector.extract_strided_slice %73 {offsets = [0, 0, 0], sizes = [2, 1, 16], strides = [1, 1, 1]} : vector<2x8x16xf32> to vector<2x1x16xf32>
    %75 = vector.shape_cast %74 : vector<2x1x16xf32> to vector<2x16xf32>
    %c656 = arith.constant 656 : index
    %c0_30 = arith.constant 0 : index
    %76 = vector.load %arg1[%c656, %c0_30] : memref<1056x128xf32, #tpu.memory_space<vmem>>, vector<16x128xf32>
    %cst_31 = arith.constant dense<0.000000e+00> : vector<2x128xf32>
    %77 = tpu.matmul %75, %76, %cst_31 {dimension_numbers = #tpu.dot_dimension_numbers<[1], [0], [0], [1], [0, 0, 1, 1], [], []>} : vector<2x16xf32>, vector<16x128xf32>, vector<2x128xf32> -> vector<2x128xf32>
    %c672 = arith.constant 672 : index
    %c0_32 = arith.constant 0 : index
    %78 = vector.load %arg1[%c672, %c0_32] : memref<1056x128xf32, #tpu.memory_space<vmem>>, vector<128x128xf32>
    %cst_33 = arith.constant dense<0.000000e+00> : vector<2x128xf32>
    %79 = tpu.matmul %72, %78, %cst_33 {dimension_numbers = #tpu.dot_dimension_numbers<[1], [0], [0], [1], [0, 0, 1, 1], [], []>} : vector<2x128xf32>, vector<128x128xf32>, vector<2x128xf32> -> vector<2x128xf32>
    %80 = arith.addf %77, %79 : vector<2x128xf32>
    %81 = vector.extract_strided_slice %0 {offsets = [5, 0], sizes = [1, 128], strides = [1, 1]} : vector<8x128xf32> to vector<1x128xf32>
    %82 = vector.broadcast %81 : vector<1x128xf32> to vector<2x128xf32>
    %83 = arith.addf %80, %82 : vector<2x128xf32>
    %cst_34 = arith.constant 0.000000e+00 : f32
    %84 = vector.broadcast %cst_34 : f32 to vector<2x128xf32>
    %85 = arith.maximumf %83, %84 : vector<2x128xf32>
    %c800 = arith.constant 800 : index
    %c0_35 = arith.constant 0 : index
    %86 = vector.load %arg1[%c800, %c0_35] : memref<1056x128xf32, #tpu.memory_space<vmem>>, vector<128x128xf32>
    %cst_36 = arith.constant dense<0.000000e+00> : vector<2x128xf32>
    %87 = tpu.matmul %85, %86, %cst_36 {dimension_numbers = #tpu.dot_dimension_numbers<[1], [0], [0], [1], [0, 0, 1, 1], [], []>} : vector<2x128xf32>, vector<128x128xf32>, vector<2x128xf32> -> vector<2x128xf32>
    %88 = vector.extract_strided_slice %0 {offsets = [6, 0], sizes = [1, 128], strides = [1, 1]} : vector<8x128xf32> to vector<1x128xf32>
    %89 = vector.broadcast %88 : vector<1x128xf32> to vector<2x128xf32>
    %90 = arith.addf %87, %89 : vector<2x128xf32>
    %cst_37 = arith.constant 0.000000e+00 : f32
    %91 = vector.broadcast %cst_37 : f32 to vector<2x128xf32>
    %92 = arith.maximumf %90, %91 : vector<2x128xf32>
    %c928 = arith.constant 928 : index
    %c0_38 = arith.constant 0 : index
    %93 = vector.load %arg1[%c928, %c0_38] : memref<1056x128xf32, #tpu.memory_space<vmem>>, vector<128x128xf32>
    %cst_39 = arith.constant dense<0.000000e+00> : vector<2x128xf32>
    %94 = tpu.matmul %92, %93, %cst_39 {dimension_numbers = #tpu.dot_dimension_numbers<[1], [0], [0], [1], [0, 0, 1, 1], [], []>} : vector<2x128xf32>, vector<128x128xf32>, vector<2x128xf32> -> vector<2x128xf32>
    %95 = vector.extract_strided_slice %0 {offsets = [7, 0], sizes = [1, 128], strides = [1, 1]} : vector<8x128xf32> to vector<1x128xf32>
    %96 = vector.broadcast %95 : vector<1x128xf32> to vector<2x128xf32>
    %97 = arith.addf %94, %96 : vector<2x128xf32>
    %98 = vector.extract_strided_slice %97 {offsets = [0, 0], sizes = [2, 64], strides = [1, 1]} : vector<2x128xf32> to vector<2x64xf32>
    %cst_40 = arith.constant 0.000000e+00 : f32
    %99 = vector.broadcast %cst_40 : f32 to vector<2x56xf32>
    %100 = tpu.concatenate %98, %68, %99 in 1 : vector<2x64xf32>, vector<2x8xf32>, vector<2x56xf32> -> vector<2x128xf32>
    %c0_41 = arith.constant 0 : index
    %c0_42 = arith.constant 0 : index
    %101 = vector.load %arg3[%c0_41, %c0_42] : memref<2x128xf32, #tpu.memory_space<vmem>>, vector<2x128xf32>
    tpu.vector_store %arg3[%c0_41, %c0_42], %100 {strides = array<i32>} : memref<2x128xf32, #tpu.memory_space<vmem>>, vector<2x128xf32>,
    return
  }
}

</mosaic_0001>

<llo_original>
// kernel: forward.1
$region0: #{forward.1}
  #allocation0 [shape = 'u32[]', space=smem, size = 0x4, offset = 0x4, fixed_abs, tag = 'smem constant byte address 0x4 - core index']
  #allocation1 [shape = 'u32[72,128]{1,0:T(1,128)}', space=vmem, size = 0x9000, scoped, tag = 'internal scratch']
  %s0 = inlined_call_operand.hbm [shape: f32[2,8,13], index: 0, kind: input, shape index: {}]
  %s1 = inlined_call_operand.hbm [shape: f32[1056,128], index: 1, kind: input, shape index: {}]
  %s2 = inlined_call_operand.hbm [shape: f32[8,128], index: 2, kind: input, shape index: {}]
  %s3 = inlined_call_operand.vmem [shape: f32[2,128], index: 3, kind: output, shape index: {}]
  %s4 = sld [smem:[#allocation0]]
  $region34: #{forward.1} parent=0
    _
  %s6 = ssub.s32 1, %s4
  %s7 = scalar_select 0, %s6, %s4
  $region1: #{forward.1} parent=0
    #allocation2 [shape = 'u8[8192]{0}', space=vmem, size = 0x2000, scoped, tag = 'input window, operand 0, single buffered']
    #allocation3 [shape = 's32[1]{0}', space=sflag, size = 0x4, scoped, tag = 'scoped memory for forward.1']
    #allocation4 [shape = 'u8[540672]{0}', space=vmem, size = 0x84000, scoped, tag = 'input window, operand 1, single buffered']
    #allocation5 [shape = 's32[1]{0}', space=sflag, size = 0x4, scoped, tag = 'scoped memory for forward.1']
    #allocation6 [shape = 'u8[4096]{0}', space=vmem, size = 0x1000, scoped, tag = 'input window, operand 2, single buffered']
    %8 = vsyncpa [#allocation3], 0
    %9 = vsyncpa [#allocation5], 0
    // Predicated region
    $region2: #{forward.1} parent=1 // pred_check
      _
    $region3: #{forward.1} parent=1 // pred_check_branch
      %11 = sbr.rel (0) target = $region5
    $region4: #{forward.1} parent=1 // pred_region
      %13 = vsyncadd [#allocation3], 0
      %s14 = sshll.u32 %s0, 4
      %s15 = int_to_ptr.hbm [resolvable:$true] %s14
      %s16 = sshll.u32 [#allocation2], 4
      %s17 = int_to_ptr.vmem [resolvable:$true] %s16
      %22 = dma.hbm_to_vmem [thread:$0]  %s15, 256, %s17, [#allocation3], 128, 128, 8
    $region5: #{forward.1} parent=1 // pred_fallthru
      _
    // Predicated region
    $region6: #{forward.1} parent=1 // pred_check
      _
    $region7: #{forward.1} parent=1 // pred_check_branch
      %24 = sbr.rel (0) target = $region9
    $region8: #{forward.1} parent=1 // pred_region
      %26 = vsyncadd [#allocation5], 0
      %s27 = sshll.u32 %s1, 4
      %s28 = int_to_ptr.hbm [resolvable:$true] %s27
      %s29 = sshll.u32 [#allocation4], 4
      %s30 = int_to_ptr.vmem [resolvable:$true] %s29
      %35 = dma.hbm_to_vmem [thread:$0]  %s28, 16896, %s30, [#allocation5], 128, 128, 8
    $region9: #{forward.1} parent=1 // pred_fallthru
      _
    // Predicated region
    $region10: #{forward.1} parent=1 // pred_check
      _
    $region11: #{forward.1} parent=1 // pred_check_branch
      %37 = sbr.rel (0) target = $region13
    $region12: #{forward.1} parent=1 // pred_region
      %39 = vsyncadd [#allocation5], 0
      %s41 = sshll.u32 %s2, 4
      %s42 = int_to_ptr.hbm [resolvable:$true] %s41
      %s43 = sshll.u32 [#allocation6], 4
      %s44 = int_to_ptr.vmem [resolvable:$true] %s43
      %46 = dma.hbm_to_vmem [thread:$0]  %s42, 128, %s44, [#allocation5]
    $region13: #{forward.1} parent=1 // pred_fallthru
      _
    // Predicated region
    $region14: #{forward.1} parent=1 // pred_check
      _
    $region15: #{forward.1} parent=1 // pred_check_branch
      %48 = sbr.rel (0) target = $region17
    $region16: #{forward.1} parent=1 // pred_region
      %50 = dma.done [#allocation3], 256
    $region17: #{forward.1} parent=1 // pred_fallthru
      _
    // Predicated region
    $region18: #{forward.1} parent=1 // pred_check
      _
    $region19: #{forward.1} parent=1 // pred_check_branch
      %52 = sbr.rel (0) target = $region21
    $region20: #{forward.1} parent=1 // pred_region
      %54 = dma.done [#allocation5], 16896
    $region21: #{forward.1} parent=1 // pred_fallthru
      _
    // Predicated region
    $region22: #{forward.1} parent=1 // pred_check
      _
    $region23: #{forward.1} parent=1 // pred_check_branch
      %56 = sbr.rel (0) target = $region25
    $region24: #{forward.1} parent=1 // pred_region
      %58 = dma.done [#allocation5], 128
    $region25: #{forward.1} parent=1 // pred_fallthru
      _
    %v59 = vld [vmem:[#allocation6] sm:$0xff]
    %v60 = vld [vmem:[#allocation2] sm:$0xff]
    %v61 = vld [vmem:[#allocation2 + $0x8] sm:$0xff]
    %vm62 = vcmask 105472
    %v63 = vsel %vm62, %v60, 0.0
    %v64 = vsel %vm62, %v61, 0.0
    %v65 = vld [vmem:[#allocation4] sm:$0xff]
    %v66 = vld [vmem:[#allocation4 + $0x8] sm:$0xff]
    %v67 = vperm.slane %v59, 0
    %vm68 = vcmask 130048
    %v70 = vsel %vm68, %v63, 0
    %v73 = vsel %vm68, %v64, 0
    %75 = vmatpush.msra.mxu0 0.0
    %76 = vmatpush.msra.mxu0 0.0
    %77 = vmatpush.msra.mxu0 0.0
    %78 = vmatpush.msra.mxu0 0.0
    %79 = vmatpush.msra.mxu0 0.0
    %80 = vmatpush.msra.mxu0 0.0
    %81 = vmatpush.msra.mxu0 0.0
    %82 = vmatpush.msra.mxu0 0.0
    %83 = vmatpush.msra.mxu0 0.0
    %84 = vmatpush.msra.mxu0 0.0
    %85 = vmatpush.msra.mxu0 0.0
    %86 = vmatpush.msra.mxu0 0.0
    %87 = vmatpush.msra.mxu0 0.0
    %88 = vmatpush.msra.mxu0 0.0
    %89 = vmatpush.msra.mxu0 %v66
    %90 = vmatpush.msra.mxu0 %v65
    %91 = vmatmul.f32.gmra.mxu0 %v70
    %v92 = vpop.f32.mrf.mxu0
    %v93 = vadd.f32 %v67, %v92
    %94 = vmatmul.f32.gmra.mxu0 %v73
    %v95 = vpop.f32.mrf.mxu0
    %v96 = vadd.f32 %v67, %v95
    %97 = vdwg.mxu0
    %v98 = vmax.f32 %v93, 0.0
    %v99 = vmax.f32 %v96, 0.0
    %v100 = vld [vmem:[#allocation4 + $0x10] sm:$0xff]
    %v101 = vld [vmem:[#allocation4 + $0x18] sm:$0xff]
    %v102 = vld [vmem:[#allocation4 + $0x20] sm:$0xff]
    %v103 = vld [vmem:[#allocation4 + $0x28] sm:$0xff]
    %v104 = vld [vmem:[#allocation4 + $0x30] sm:$0xff]
    %v105 = vld [vmem:[#allocation4 + $0x38] sm:$0xff]
    %v106 = vld [vmem:[#allocation4 + $0x40] sm:$0xff]
    %v107 = vld [vmem:[#allocation4 + $0x48] sm:$0xff]
    %v108 = vld [vmem:[#allocation4 + $0x50] sm:$0xff]
    %v109 = vld [vmem:[#allocation4 + $0x58] sm:$0xff]
    %v110 = vld [vmem:[#allocation4 + $0x60] sm:$0xff]
    %v111 = vld [vmem:[#allocation4 + $0x68] sm:$0xff]
    %v112 = vld [vmem:[#allocation4 + $0x70] sm:$0xff]
    %v113 = vld [vmem:[#allocation4 + $0x78] sm:$0xff]
    %v114 = vld [vmem:[#allocation4 + $0x80] sm:$0xff]
    %v115 = vld [vmem:[#allocation4 + $0x88] sm:$0xff]
    %v116 = vperm.slane %v59, 1
    %117 = vmatpush.msra.mxu0 %v115
    %118 = vmatpush.msra.mxu0 %v114
    %119 = vmatpush.msra.mxu0 %v113
    %120 = vmatpush.msra.mxu0 %v112
    %121 = vmatpush.msra.mxu0 %v111
    %122 = vmatpush.msra.mxu0 %v110
    %123 = vmatpush.msra.mxu0 %v109
    %124 = vmatpush.msra.mxu0 %v108
    %125 = vmatpush.msra.mxu0 %v107
    %126 = vmatpush.msra.mxu0 %v106
    %127 = vmatpush.msra.mxu0 %v105
    %128 = vmatpush.msra.mxu0 %v104
    %129 = vmatpush.msra.mxu0 %v103
    %130 = vmatpush.msra.mxu0 %v102
    %131 = vmatpush.msra.mxu0 %v101
    %132 = vmatpush.msra.mxu0 %v100
    %133 = vmatmul.f32.gmra.mxu0 %v98
    %v134 = vpop.f32.mrf.mxu0
    %v135 = vadd.f32 %v116, %v134
    %136 = vmatmul.f32.gmra.mxu0 %v99
    %v137 = vpop.f32.mrf.mxu0
    %v138 = vadd.f32 %v116, %v137
    %139 = vdwg.mxu0
    %v140 = vmax.f32 %v135, 0.0
    %v141 = vmax.f32 %v138, 0.0
    %v142 = vrot.slane %v140, 4
    %v143 = vadd.f32 %v140, %v142
    %v144 = vrot.slane %v143, 2
    %v145 = vadd.f32 %v143, %v144
    %v146 = vrot.slane %v145, 1
    %v147 = vadd.f32 %v145, %v146
    %v148 = vrot.slane %v141, 4
    %v149 = vadd.f32 %v141, %v148
    %v150 = vrot.slane %v149, 2
    %v151 = vadd.f32 %v149, %v150
    %v152 = vrot.slane %v151, 1
    %v153 = vadd.f32 %v151, %v152
    %v154 = vrcp.pop 8.0
    %v155 = vmul.f32 8.0, %v154
    %v156 = vsub.f32 1.0, %v155
    %v157 = vmul.f32 %v154, %v156
    %v158 = vadd.f32 %v154, %v157
    %vm159 = vweird.f32 %v154
    %v160 = vsel %vm159, %v154, %v158
    %v161 = vmul.f32 %v147, %v160
    %v162 = vmul.f32 %v153, %v160
    %v163 = vld [vmem:[#allocation4 + $0x110] sm:$0xff]
    %v164 = vld [vmem:[#allocation4 + $0x118] sm:$0xff]
    %v165 = vld [vmem:[#allocation4 + $0x120] sm:$0xff]
    %v166 = vld [vmem:[#allocation4 + $0x128] sm:$0xff]
    %v167 = vld [vmem:[#allocation4 + $0x130] sm:$0xff]
    %v168 = vld [vmem:[#allocation4 + $0x138] sm:$0xff]
    %v169 = vld [vmem:[#allocation4 + $0x140] sm:$0xff]
    %v170 = vld [vmem:[#allocation4 + $0x148] sm:$0xff]
    %v171 = vld [vmem:[#allocation4 + $0x150] sm:$0xff]
    %v172 = vld [vmem:[#allocation4 + $0x158] sm:$0xff]
    %v173 = vld [vmem:[#allocation4 + $0x160] sm:$0xff]
    %v174 = vld [vmem:[#allocation4 + $0x168] sm:$0xff]
    %v175 = vld [vmem:[#allocation4 + $0x170] sm:$0xff]
    %v176 = vld [vmem:[#allocation4 + $0x178] sm:$0xff]
    %v177 = vld [vmem:[#allocation4 + $0x180] sm:$0xff]
    %v178 = vld [vmem:[#allocation4 + $0x188] sm:$0xff]
    %vm181 = vcmask 1041409
    %v182 = vsel %vm181, %v162, %v161
    %184 = vmatpush.msra.mxu0 %v178
    %185 = vmatpush.msra.mxu0 %v177
    %186 = vmatpush.msra.mxu0 %v176
    %187 = vmatpush.msra.mxu0 %v175
    %188 = vmatpush.msra.mxu0 %v174
    %189 = vmatpush.msra.mxu0 %v173
    %190 = vmatpush.msra.mxu0 %v172
    %191 = vmatpush.msra.mxu0 %v171
    %192 = vmatpush.msra.mxu0 %v170
    %193 = vmatpush.msra.mxu0 %v169
    %194 = vmatpush.msra.mxu0 %v168
    %195 = vmatpush.msra.mxu0 %v167
    %196 = vmatpush.msra.mxu0 %v166
    %197 = vmatpush.msra.mxu0 %v165
    %198 = vmatpush.msra.mxu0 %v164
    %199 = vmatpush.msra.mxu0 %v163
    %200 = vmatmul.f32.gmra.mxu0 %v182
    %v201 = vpop.f32.mrf.mxu0
    %v202 = vadd.f32 0.0, %v201
    %203 = vdwg.mxu0
    %v204 = vld [vmem:[#allocation4 + $0x90] sm:$0xff]
    %v205 = vld [vmem:[#allocation4 + $0x98] sm:$0xff]
    %v206 = vld [vmem:[#allocation4 + $0xa0] sm:$0xff]
    %v207 = vld [vmem:[#allocation4 + $0xa8] sm:$0xff]
    %v208 = vld [vmem:[#allocation4 + $0xb0] sm:$0xff]
    %v209 = vld [vmem:[#allocation4 + $0xb8] sm:$0xff]
    %v210 = vld [vmem:[#allocation4 + $0xc0] sm:$0xff]
    %v211 = vld [vmem:[#allocation4 + $0xc8] sm:$0xff]
    %v212 = vld [vmem:[#allocation4 + $0xd0] sm:$0xff]
    %v213 = vld [vmem:[#allocation4 + $0xd8] sm:$0xff]
    %v214 = vld [vmem:[#allocation4 + $0xe0] sm:$0xff]
    %v215 = vld [vmem:[#allocation4 + $0xe8] sm:$0xff]
    %v216 = vld [vmem:[#allocation4 + $0xf0] sm:$0xff]
    %v217 = vld [vmem:[#allocation4 + $0xf8] sm:$0xff]
    %v218 = vld [vmem:[#allocation4 + $0x100] sm:$0xff]
    %v219 = vld [vmem:[#allocation4 + $0x108] sm:$0xff]
    %v220 = vperm.slane %v59, 2
    %221 = vmatpush.msra.mxu0 %v219
    %222 = vmatpush.msra.mxu0 %v218
    %223 = vmatpush.msra.mxu0 %v217
    %224 = vmatpush.msra.mxu0 %v216
    %225 = vmatpush.msra.mxu0 %v215
    %226 = vmatpush.msra.mxu0 %v214
    %227 = vmatpush.msra.mxu0 %v213
    %228 = vmatpush.msra.mxu0 %v212
    %229 = vmatpush.msra.mxu0 %v211
    %230 = vmatpush.msra.mxu0 %v210
    %231 = vmatpush.msra.mxu0 %v209
    %232 = vmatpush.msra.mxu0 %v208
    %233 = vmatpush.msra.mxu0 %v207
    %234 = vmatpush.msra.mxu0 %v206
    %235 = vmatpush.msra.mxu0 %v205
    %236 = vmatpush.msra.mxu0 %v204
    %237 = vmatmul.f32.gmra.mxu0 %v140
    %v238 = vpop.f32.mrf.mxu0
    %v239 = vadd.f32 %v220, %v238
    %240 = vmatmul.f32.gmra.mxu0 %v141
    %v241 = vpop.f32.mrf.mxu0
    %v242 = vadd.f32 %v220, %v241
    %243 = vdwg.mxu0
    %v245 = vrot.slane %v202, 1
    %v246 = vperm.slane %v202, 0
    %v247 = vperm.slane %v245, 0
    %v250 = vadd.f32 %v239, %v246
    %v251 = vadd.f32 %v242, %v247
    %v252 = vmax.f32 %v250, 0.0
    %v253 = vmax.f32 %v251, 0.0
    %v254 = vld [vmem:[#allocation4 + $0x190] sm:$0xff]
    %v255 = vld [vmem:[#allocation4 + $0x198] sm:$0xff]
    %v256 = vld [vmem:[#allocation4 + $0x1a0] sm:$0xff]
    %v257 = vld [vmem:[#allocation4 + $0x1a8] sm:$0xff]
    %v258 = vld [vmem:[#allocation4 + $0x1b0] sm:$0xff]
    %v259 = vld [vmem:[#allocation4 + $0x1b8] sm:$0xff]
    %v260 = vld [vmem:[#allocation4 + $0x1c0] sm:$0xff]
    %v261 = vld [vmem:[#allocation4 + $0x1c8] sm:$0xff]
    %v262 = vld [vmem:[#allocation4 + $0x1d0] sm:$0xff]
    %v263 = vld [vmem:[#allocation4 + $0x1d8] sm:$0xff]
    %v264 = vld [vmem:[#allocation4 + $0x1e0] sm:$0xff]
    %v265 = vld [vmem:[#allocation4 + $0x1e8] sm:$0xff]
    %v266 = vld [vmem:[#allocation4 + $0x1f0] sm:$0xff]
    %v267 = vld [vmem:[#allocation4 + $0x1f8] sm:$0xff]
    %v268 = vld [vmem:[#allocation4 + $0x200] sm:$0xff]
    %v269 = vld [vmem:[#allocation4 + $0x208] sm:$0xff]
    %v270 = vperm.slane %v59, 3
    %271 = vmatpush.msra.mxu0 %v269
    %272 = vmatpush.msra.mxu0 %v268
    %273 = vmatpush.msra.mxu0 %v267
    %274 = vmatpush.msra.mxu0 %v266
    %275 = vmatpush.msra.mxu0 %v265
    %276 = vmatpush.msra.mxu0 %v264
    %277 = vmatpush.msra.mxu0 %v263
    %278 = vmatpush.msra.mxu0 %v262
    %279 = vmatpush.msra.mxu0 %v261
    %280 = vmatpush.msra.mxu0 %v260
    %281 = vmatpush.msra.mxu0 %v259
    %282 = vmatpush.msra.mxu0 %v258
    %283 = vmatpush.msra.mxu0 %v257
    %284 = vmatpush.msra.mxu0 %v256
    %285 = vmatpush.msra.mxu0 %v255
    %286 = vmatpush.msra.mxu0 %v254
    %287 = vmatmul.f32.gmra.mxu0 %v252
    %v288 = vpop.f32.mrf.mxu0
    %v289 = vadd.f32 %v270, %v288
    %290 = vmatmul.f32.gmra.mxu0 %v253
    %v291 = vpop.f32.mrf.mxu0
    %v292 = vadd.f32 %v270, %v291
    %293 = vdwg.mxu0
    %v294 = vmax.f32 %v289, 0.0
    %v295 = vmax.f32 %v292, 0.0
    %v296 = vld [vmem:[#allocation4 + $0x210] sm:$0xff]
    %v297 = vld [vmem:[#allocation4 + $0x218] sm:$0xff]
    %v298 = vld [vmem:[#allocation4 + $0x220] sm:$0xff]
    %v299 = vld [vmem:[#allocation4 + $0x228] sm:$0xff]
    %v300 = vld [vmem:[#allocation4 + $0x230] sm:$0xff]
    %v301 = vld [vmem:[#allocation4 + $0x238] sm:$0xff]
    %v302 = vld [vmem:[#allocation4 + $0x240] sm:$0xff]
    %v303 = vld [vmem:[#allocation4 + $0x248] sm:$0xff]
    %v304 = vld [vmem:[#allocation4 + $0x250] sm:$0xff]
    %v305 = vld [vmem:[#allocation4 + $0x258] sm:$0xff]
    %v306 = vld [vmem:[#allocation4 + $0x260] sm:$0xff]
    %v307 = vld [vmem:[#allocation4 + $0x268] sm:$0xff]
    %v308 = vld [vmem:[#allocation4 + $0x270] sm:$0xff]
    %v309 = vld [vmem:[#allocation4 + $0x278] sm:$0xff]
    %v310 = vld [vmem:[#allocation4 + $0x280] sm:$0xff]
    %v311 = vld [vmem:[#allocation4 + $0x288] sm:$0xff]
    %v312 = vperm.slane %v59, 4
    %313 = vmatpush.msra.mxu0 %v311
    %314 = vmatpush.msra.mxu0 %v310
    %315 = vmatpush.msra.mxu0 %v309
    %316 = vmatpush.msra.mxu0 %v308
    %317 = vmatpush.msra.mxu0 %v307
    %318 = vmatpush.msra.mxu0 %v306
    %319 = vmatpush.msra.mxu0 %v305
    %320 = vmatpush.msra.mxu0 %v304
    %321 = vmatpush.msra.mxu0 %v303
    %322 = vmatpush.msra.mxu0 %v302
    %323 = vmatpush.msra.mxu0 %v301
    %324 = vmatpush.msra.mxu0 %v300
    %325 = vmatpush.msra.mxu0 %v299
    %326 = vmatpush.msra.mxu0 %v298
    %327 = vmatpush.msra.mxu0 %v297
    %328 = vmatpush.msra.mxu0 %v296
    %329 = vmatmul.f32.gmra.mxu0 %v294
    %v330 = vpop.f32.mrf.mxu0
    %v331 = vadd.f32 %v312, %v330
    %332 = vmatmul.f32.gmra.mxu0 %v295
    %v333 = vpop.f32.mrf.mxu0
    %v334 = vadd.f32 %v312, %v333
    %335 = vdwg.mxu0
    %336 = vadd.xlane.f32.xlu0 %v331
    %v337 = vpop.xlane.xlu0 %336
    %338 = vadd.xlane.f32.xlu0 %v334
    %v339 = vpop.xlane.xlu0 %338
    %vm340 = vcmp.ne.f32.partialorder %v337, 0.0
    %vm341 = vcmp.ne.f32.partialorder %v339, 0.0
    %v342 = vsel %vm340, 1, 0
    %v343 = vsel %vm341, 1, 0
    %v344 = vcvt.s32.f32 %v342
    %v345 = vcvt.s32.f32 %v343
    %v348 = vlaneseq
    %v349 = vand.u32 %v348, 127
    %v350 = vperm.slane %v337, %v349
    %v351 = vperm.slane %v339, %v349
    %v352 = vsel %vm181, %v351, %v350
    %vm354 = vcmask 58368
    %v355 = vsel %vm354, %v352, -inf
    %356 = vmax.xlane.f32.xlu0 %v355
    %v357 = vpop.xlane.xlu0 %356
    %v359 = vperm.slane %v357, 0
    %v360 = vperm.slane %v357, 1
    %v363 = vsub.f32 %v337, %v359
    %v364 = vsub.f32 %v339, %v360
    %v365 = vmul.f32 %v363, 1.442695
    %v366 = vpow.pop %v365
    %v367 = vmul.f32 %v364, 1.442695
    %v368 = vpow.pop %v367
    %v369 = vmul.f32 %v366, %v344
    %v370 = vmul.f32 %v368, %v345
    %373 = vset.pattern.permute.xlu0 0
    %374 = vperm.xlu0 %373, %v369
    %v375 = vpop.permute.xlu0 %374
    %376 = vset.pattern.permute.xlu0 0
    %377 = vperm.xlu0 %376, %v370
    %v378 = vpop.permute.xlu0 %377
    %v379 = vperm.slane %v375, %v349
    %v380 = vperm.slane %v378, %v349
    %v381 = vsel %vm181, %v380, %v379
    %v383 = vsel %vm354, %v381, 0.0
    %384 = vadd.xlane.f32.xlu0 %v383
    %v385 = vpop.xlane.xlu0 %384
    %vm386 = vcmp.eq.f32.partialorder %v385, 0.0
    %v387 = vsel %vm386, 1.0, %v385
    %v389 = vperm.slane %v387, 0
    %v390 = vperm.slane %v387, 1
    %v393 = vrcp.pop %v389
    %v394 = vmul.f32 %v389, %v393
    %v395 = vsub.f32 1.0, %v394
    %v396 = vmul.f32 %v393, %v395
    %v397 = vadd.f32 %v393, %v396
    %vm398 = vweird.f32 %v389
    %vm399 = vweird.f32 %v393
    %vm400 = vmor %vm398, %vm399
    %v401 = vsel %vm400, %v393, %v397
    %v402 = vand.u32 2147483647, %v389
    %vm403 = vcmp.eq.f32.partialorder %v402, 8.507059e+37
    %v404 = vand.u32 %v389, 2147483648
    %v405 = vor.u32 1.1754944e-38, %v404
    %v406 = vsel %vm403, %v405, %v401
    %v407 = vmul.f32 %v369, %v406
    %v408 = vrcp.pop %v390
    %v409 = vmul.f32 %v390, %v408
    %v410 = vsub.f32 1.0, %v409
    %v411 = vmul.f32 %v408, %v410
    %v412 = vadd.f32 %v408, %v411
    %vm413 = vweird.f32 %v390
    %vm414 = vweird.f32 %v408
    %vm415 = vmor %vm413, %vm414
    %v416 = vsel %vm415, %v408, %v412
    %v417 = vand.u32 2147483647, %v390
    %vm418 = vcmp.eq.f32.partialorder %v417, 8.507059e+37
    %v419 = vand.u32 %v390, 2147483648
    %v420 = vor.u32 1.1754944e-38, %v419
    %v421 = vsel %vm418, %v420, %v416
    %v422 = vmul.f32 %v370, %v421
    %424 = vset.pattern.permute.xlu0 0
    %425 = vperm.xlu0 %424, %v407
    %v426 = vpop.permute.xlu0 %425
    %v427 = vperm.slane %v426, %v349
    %vm428 = vcmask 64512
    %v429 = vsel %vm428, %v427, 0
    %431 = vmatpush.msra.mxu0 0.0
    %432 = vmatpush.msra.mxu0 0.0
    %433 = vmatpush.msra.mxu0 0.0
    %434 = vmatpush.msra.mxu0 0.0
    %435 = vmatpush.msra.mxu0 0.0
    %436 = vmatpush.msra.mxu0 0.0
    %437 = vmatpush.msra.mxu0 0.0
    %438 = vmatpush.msra.mxu0 0.0
    %439 = vmatpush.msra.mxu0 0.0
    %440 = vmatpush.msra.mxu0 0.0
    %441 = vmatpush.msra.mxu0 0.0
    %442 = vmatpush.msra.mxu0 0.0
    %443 = vmatpush.msra.mxu0 0.0
    %444 = vmatpush.msra.mxu0 0.0
    %445 = vmatpush.msra.mxu0 0.0
    %446 = vmatpush.msra.mxu0 %v289
    %447 = vmatmul.f32.gmra.mxu0 %v429
    %v448 = vpop.f32.mrf.mxu0
    %v449 = vadd.f32 0.0, %v448
    %450 = vdwg.mxu0
    %452 = vset.pattern.permute.xlu0 0
    %453 = vperm.xlu0 %452, %v422
    %v454 = vpop.permute.xlu0 %453
    %v455 = vperm.slane %v454, %v349
    %v456 = vsel %vm428, %v455, 0
    %458 = vmatpush.msra.mxu0 0.0
    %459 = vmatpush.msra.mxu0 0.0
    %460 = vmatpush.msra.mxu0 0.0
    %461 = vmatpush.msra.mxu0 0.0
    %462 = vmatpush.msra.mxu0 0.0
    %463 = vmatpush.msra.mxu0 0.0
    %464 = vmatpush.msra.mxu0 0.0
    %465 = vmatpush.msra.mxu0 0.0
    %466 = vmatpush.msra.mxu0 0.0
    %467 = vmatpush.msra.mxu0 0.0
    %468 = vmatpush.msra.mxu0 0.0
    %469 = vmatpush.msra.mxu0 0.0
    %470 = vmatpush.msra.mxu0 0.0
    %471 = vmatpush.msra.mxu0 0.0
    %472 = vmatpush.msra.mxu0 0.0
    %473 = vmatpush.msra.mxu0 %v292
    %474 = vmatmul.f32.gmra.mxu0 %v456
    %v475 = vpop.f32.mrf.mxu0
    %v476 = vadd.f32 0.0, %v475
    %477 = vdwg.mxu0
    %v478 = vld [vmem:[#allocation4 + $0x290] sm:$0xff]
    %v479 = vld [vmem:[#allocation4 + $0x298] sm:$0xff]
    %v480 = vld [vmem:[#allocation4 + $0x2a0] sm:$0xff]
    %v481 = vld [vmem:[#allocation4 + $0x2a8] sm:$0xff]
    %v482 = vld [vmem:[#allocation4 + $0x2b0] sm:$0xff]
    %v483 = vld [vmem:[#allocation4 + $0x2b8] sm:$0xff]
    %v484 = vld [vmem:[#allocation4 + $0x2c0] sm:$0xff]
    %v485 = vld [vmem:[#allocation4 + $0x2c8] sm:$0xff]
    %v486 = vld [vmem:[#allocation4 + $0x2d0] sm:$0xff]
    %v487 = vld [vmem:[#allocation4 + $0x2d8] sm:$0xff]
    %v488 = vld [vmem:[#allocation4 + $0x2e0] sm:$0xff]
    %v489 = vld [vmem:[#allocation4 + $0x2e8] sm:$0xff]
    %v490 = vld [vmem:[#allocation4 + $0x2f0] sm:$0xff]
    %v491 = vld [vmem:[#allocation4 + $0x2f8] sm:$0xff]
    %v492 = vld [vmem:[#allocation4 + $0x300] sm:$0xff]
    %v493 = vld [vmem:[#allocation4 + $0x308] sm:$0xff]
    %v494 = vld [vmem:[#allocation4 + $0x310] sm:$0xff]
    %v495 = vld [vmem:[#allocation4 + $0x318] sm:$0xff]
    %v498 = vrot.slane %v476, 7
    %v499 = vsel %vm181, %v498, %v449
    %501 = vmatpush.msra.mxu0 %v495
    %502 = vmatpush.msra.mxu0 %v494
    %503 = vmatpush.msra.mxu0 %v493
    %504 = vmatpush.msra.mxu0 %v492
    %505 = vmatpush.msra.mxu0 %v491
    %506 = vmatpush.msra.mxu0 %v490
    %507 = vmatpush.msra.mxu0 %v489
    %508 = vmatpush.msra.mxu0 %v488
    %509 = vmatpush.msra.mxu0 %v487
    %510 = vmatpush.msra.mxu0 %v486
    %511 = vmatpush.msra.mxu0 %v485
    %512 = vmatpush.msra.mxu0 %v484
    %513 = vmatpush.msra.mxu0 %v483
    %514 = vmatpush.msra.mxu0 %v482
    %515 = vmatpush.msra.mxu0 %v481
    %516 = vmatpush.msra.mxu0 %v480
    %517 = vmatmul.f32.gmra.mxu0 %v499
    %v518 = vpop.f32.mrf.mxu0
    %v519 = vadd.f32 0.0, %v518
    %520 = vdwg.mxu0
    %v521 = vrot.slane %v64, 7
    %v522 = vsel %vm181, %v521, %v63
    %v523 = vsel %vm68, %v522, 0
    %525 = vmatpush.msra.mxu0 0.0
    %526 = vmatpush.msra.mxu0 0.0
    %527 = vmatpush.msra.mxu0 0.0
    %528 = vmatpush.msra.mxu0 0.0
    %529 = vmatpush.msra.mxu0 0.0
    %530 = vmatpush.msra.mxu0 0.0
    %531 = vmatpush.msra.mxu0 0.0
    %532 = vmatpush.msra.mxu0 0.0
    %533 = vmatpush.msra.mxu0 0.0
    %534 = vmatpush.msra.mxu0 0.0
    %535 = vmatpush.msra.mxu0 0.0
    %536 = vmatpush.msra.mxu0 0.0
    %537 = vmatpush.msra.mxu0 0.0
    %538 = vmatpush.msra.mxu0 0.0
    %539 = vmatpush.msra.mxu0 %v479
    %540 = vmatpush.msra.mxu0 %v478
    %541 = vmatmul.f32.gmra.mxu0 %v523
    %v542 = vpop.f32.mrf.mxu0
    %v543 = vadd.f32 %v519, %v542
    %544 = vdwg.mxu0
    %v545 = vperm.slane %v59, 5
    %v546 = vadd.f32 %v543, %v545
    %v547 = vmax.f32 %v546, 0.0
    %v548 = vld [vmem:[#allocation4 + $0x320] sm:$0xff]
    %v549 = vld [vmem:[#allocation4 + $0x328] sm:$0xff]
    %v550 = vld [vmem:[#allocation4 + $0x330] sm:$0xff]
    %v551 = vld [vmem:[#allocation4 + $0x338] sm:$0xff]
    %v552 = vld [vmem:[#allocation4 + $0x340] sm:$0xff]
    %v553 = vld [vmem:[#allocation4 + $0x348] sm:$0xff]
    %v554 = vld [vmem:[#allocation4 + $0x350] sm:$0xff]
    %v555 = vld [vmem:[#allocation4 + $0x358] sm:$0xff]
    %v556 = vld [vmem:[#allocation4 + $0x360] sm:$0xff]
    %v557 = vld [vmem:[#allocation4 + $0x368] sm:$0xff]
    %v558 = vld [vmem:[#allocation4 + $0x370] sm:$0xff]
    %v559 = vld [vmem:[#allocation4 + $0x378] sm:$0xff]
    %v560 = vld [vmem:[#allocation4 + $0x380] sm:$0xff]
    %v561 = vld [vmem:[#allocation4 + $0x388] sm:$0xff]
    %v562 = vld [vmem:[#allocation4 + $0x390] sm:$0xff]
    %v563 = vld [vmem:[#allocation4 + $0x398] sm:$0xff]
    %v564 = vperm.slane %v59, 6
    %565 = vmatpush.msra.mxu0 %v563
    %566 = vmatpush.msra.mxu0 %v562
    %567 = vmatpush.msra.mxu0 %v561
    %568 = vmatpush.msra.mxu0 %v560
    %569 = vmatpush.msra.mxu0 %v559
    %570 = vmatpush.msra.mxu0 %v558
    %571 = vmatpush.msra.mxu0 %v557
    %572 = vmatpush.msra.mxu0 %v556
    %573 = vmatpush.msra.mxu0 %v555
    %574 = vmatpush.msra.mxu0 %v554
    %575 = vmatpush.msra.mxu0 %v553
    %576 = vmatpush.msra.mxu0 %v552
    %577 = vmatpush.msra.mxu0 %v551
    %578 = vmatpush.msra.mxu0 %v550
    %579 = vmatpush.msra.mxu0 %v549
    %580 = vmatpush.msra.mxu0 %v548
    %581 = vmatmul.f32.gmra.mxu0 %v547
    %v582 = vpop.f32.mrf.mxu0
    %v583 = vadd.f32 %v564, %v582
    %584 = vdwg.mxu0
    %v585 = vmax.f32 %v583, 0.0
    %v586 = vld [vmem:[#allocation4 + $0x3a0] sm:$0xff]
    %v587 = vld [vmem:[#allocation4 + $0x3a8] sm:$0xff]
    %v588 = vld [vmem:[#allocation4 + $0x3b0] sm:$0xff]
    %v589 = vld [vmem:[#allocation4 + $0x3b8] sm:$0xff]
    %v590 = vld [vmem:[#allocation4 + $0x3c0] sm:$0xff]
    %v591 = vld [vmem:[#allocation4 + $0x3c8] sm:$0xff]
    %v592 = vld [vmem:[#allocation4 + $0x3d0] sm:$0xff]
    %v593 = vld [vmem:[#allocation4 + $0x3d8] sm:$0xff]
    %v594 = vld [vmem:[#allocation4 + $0x3e0] sm:$0xff]
    %v595 = vld [vmem:[#allocation4 + $0x3e8] sm:$0xff]
    %v596 = vld [vmem:[#allocation4 + $0x3f0] sm:$0xff]
    %v597 = vld [vmem:[#allocation4 + $0x3f8] sm:$0xff]
    %v598 = vld [vmem:[#allocation4 + $0x400] sm:$0xff]
    %v599 = vld [vmem:[#allocation4 + $0x408] sm:$0xff]
    %v600 = vld [vmem:[#allocation4 + $0x410] sm:$0xff]
    %v601 = vld [vmem:[#allocation4 + $0x418] sm:$0xff]
    %v602 = vperm.slane %v59, 7
    %603 = vmatpush.msra.mxu0 %v601
    %604 = vmatpush.msra.mxu0 %v600
    %605 = vmatpush.msra.mxu0 %v599
    %606 = vmatpush.msra.mxu0 %v598
    %607 = vmatpush.msra.mxu0 %v597
    %608 = vmatpush.msra.mxu0 %v596
    %609 = vmatpush.msra.mxu0 %v595
    %610 = vmatpush.msra.mxu0 %v594
    %611 = vmatpush.msra.mxu0 %v593
    %612 = vmatpush.msra.mxu0 %v592
    %613 = vmatpush.msra.mxu0 %v591
    %614 = vmatpush.msra.mxu0 %v590
    %615 = vmatpush.msra.mxu0 %v589
    %616 = vmatpush.msra.mxu0 %v588
    %617 = vmatpush.msra.mxu0 %v587
    %618 = vmatpush.msra.mxu0 %v586
    %619 = vmatmul.f32.gmra.mxu0 %v585
    %v620 = vpop.f32.mrf.mxu0
    %v621 = vadd.f32 %v602, %v620
    %622 = vdwg.mxu0
    %v623 = vadd.s32 %v349, 4294967232
    %v624 = vperm.slane %v426, %v623
    %v625 = vperm.slane %v454, %v623
    %v626 = vsel %vm181, %v625, %v624
    %vm628 = vcmask 523264
    %v629 = vsel %vm628, %v621, %v626
    %vm630 = vcmask 588800
    %v631 = vsel %vm630, %v629, 0.0
    %632 = vst [vmem:[%s3] sm:$0x3] %v631
    // Predicated region
    $region26: #{forward.1} parent=1 // pred_check
      _
    $region27: #{forward.1} parent=1 // pred_check_branch
      %634 = sbr.rel (0) target = $region29
    $region28: #{forward.1} parent=1 // pred_region
      _
    $region29: #{forward.1} parent=1 // pred_fallthru
      _
    // Predicated region
    $region30: #{forward.1} parent=1 // pred_check
      _
    $region31: #{forward.1} parent=1 // pred_check_branch
      %636 = sbr.rel (0) target = $region33
    $region32: #{forward.1} parent=1 // pred_region
      _
    $region33: #{forward.1} parent=1 // pred_fallthru
      _
    %637 = vsyncpa [#allocation3], 1
    %638 = vsyncpa [#allocation5], 1

</llo_original>
